<compile_context>
chip_gen: v5e
topology: v5e:2x2
jax: 0.10.0
libtpu: 0.0.40
codegen_flags: <defaults>
</compile_context>

<pallas_src>
import jax
import jax.numpy as jnp
from jax.experimental import pallas as pl
from jax.experimental.pallas import tpu as pltpu


def _critic_kernel(s_ref, a_ref, w1s_ref, w1a_ref, b1_ref, w2_ref, b2_ref,
                   w3_ref, b3_ref, q_ref):
    # h1 = relu(state @ W1s + action @ W1a + b1)   (concat-free first layer)
    h1 = jnp.dot(s_ref[...], w1s_ref[...], preferred_element_type=jnp.float32)
    h1 = h1 + jnp.dot(a_ref[...], w1a_ref[...],
                      preferred_element_type=jnp.float32)
    h1 = jnp.maximum(h1 + b1_ref[...], 0.0)

    # h2 = relu(h1 @ W2 + b2)   (the only FLOP-heavy matmul)
    h2 = jnp.dot(h1, w2_ref[...], preferred_element_type=jnp.float32)
    h2 = jnp.maximum(h2 + b2_ref[...], 0.0)

    # q = h2 @ W3 + b3 with N=1 -> VPU multiply + lane reduction (no MXU).
    q = jnp.sum(h2 * w3_ref[...], axis=-1, keepdims=True) + b3_ref[...]
    q_ref[...] = q.astype(q_ref.dtype)


def _round_up(x, m):
    return (x + m - 1) // m * m


def _choose_batch_tile(B, block_rows):
    """Per-step batch tile.

    Single step when B fits the cap (extra grid steps are pure overhead on
    single-TC v5e/v6e).  Otherwise split B into an EVEN number of near-equal
    tiles so the "parallel" batch axis balances across v7x's two TensorCores,
    256-aligning the tile when that does not change the tile count.
    """
    if B <= block_rows:
        return _round_up(B, 8)
    n = pl.cdiv(B, block_rows)
    if n % 2:
        n += 1                      # even tile count -> balanced megacore split
    tm = _round_up(pl.cdiv(B, n), 8)
    tm_aligned = _round_up(tm, 256)  # MXU row block (v6e/v7x); also 128-mult for v5e
    if pl.cdiv(B, tm_aligned) == n:
        tm = tm_aligned
    return min(tm, block_rows)


def critic_forward(state, action, params, *, block_rows=2048):
    """Critic forward pass. state: (B, S), action: (B, A) -> q: (B, 1) f32.

    Pass state/action and weights in bfloat16 for minimum HBM traffic (the
    MXU multiplies in bf16 at default precision either way); float32 inputs
    and params also work unchanged.
    """
    w1s, w1a, b1, w2, b2, w3, b3 = params
    B, S = state.shape
    A = action.shape[1]
    H1 = w1s.shape[1]
    H2 = w2.shape[1]

    tm = _choose_batch_tile(B, block_rows)
    grid = (pl.cdiv(B, tm),)

    act = lambda feat: pl.BlockSpec((tm, feat), lambda i: (i, 0))      # streamed
    res = lambda r, c: pl.BlockSpec((r, c), lambda i: (0, 0))          # resident

    flops = 2 * B * ((S + A) * H1 + H1 * H2 + H2)
    bytes_accessed = (state.nbytes + action.nbytes + w1s.nbytes + w1a.nbytes
                      + b1.nbytes + w2.nbytes + b2.nbytes + w3.nbytes
                      + b3.nbytes + B * 4)

    return pl.pallas_call(
        _critic_kernel,
        out_shape=jax.ShapeDtypeStruct((B, 1), jnp.float32),
        grid_spec=pltpu.PrefetchScalarGridSpec(
            num_scalar_prefetch=0,
            grid=grid,
            in_specs=[
                act(S),           # state tile   (tm, S)
                act(A),           # action tile  (tm, A)
                res(S, H1),       # W1[:S]   (split W1 -> no concat needed)
                res(A, H1),       # W1[S:]
                res(1, H1),       # b1 (f32)
                res(H1, H2),      # W2
                res(1, H2),       # b2 (f32)
                res(1, H2),       # w3 as a row vector (VPU mul + reduce)
                res(1, 1),        # b3 (f32)
            ],
            out_specs=pl.BlockSpec((tm, 1), lambda i: (i, 0)),
        ),
        compiler_params=pltpu.CompilerParams(
            # Batch tiles are independent -> shard across TensorCores on v7x.
            dimension_semantics=("parallel",),
        ),
        cost_estimate=pl.CostEstimate(flops=flops, transcendentals=0,
                                      bytes_accessed=bytes_accessed),
    )(state, action, w1s, w1a, b1, w2, b2, w3, b3)


def init_critic_params(key, state_dim, action_dim, hidden_sizes=(256, 256),
                       weight_dtype=jnp.bfloat16):
    """PyTorch nn.Linear-style init: U(-1/sqrt(fan_in), +1/sqrt(fan_in)).

    W1 is split into its state / action row blocks so the kernel never needs
    the concatenated (state, action) input.  Weights are stored [in, out] in
    `weight_dtype` (bf16 by default: halves weight DMA/VMEM, numerically
    equivalent to MXU default precision); biases stay float32 [1, out].  The
    last layer's weight is a (1, H2) row for the in-kernel VPU reduction.
    """
    h1, h2 = hidden_sizes

    def linear(k, d_in, d_out):
        kw, kb = jax.random.split(k)
        bound = 1.0 / (d_in ** 0.5)
        w = jax.random.uniform(kw, (d_in, d_out), jnp.float32, -bound, bound)
        b = jax.random.uniform(kb, (1, d_out), jnp.float32, -bound, bound)
        return w, b

    k1, k2, k3 = jax.random.split(key, 3)
    w1, b1 = linear(k1, state_dim + action_dim, h1)
    w2, b2 = linear(k2, h1, h2)
    w3, b3 = linear(k3, h2, 1)
    return (w1[:state_dim].astype(weight_dtype),
            w1[state_dim:].astype(weight_dtype),
            b1,
            w2.astype(weight_dtype),
            b2,
            w3.T.astype(weight_dtype),
            b3)


def reference_forward(state, action, params):
    """Module-faithful pure-JAX reference (concat + dense layers) in f32."""
    w1s, w1a, b1, w2, b2, w3_row, b3 = params
    hp = jax.lax.Precision.HIGHEST
    f32 = lambda x: x.astype(jnp.float32)
    sa = jnp.concatenate([f32(state), f32(action)], axis=1)
    w1 = jnp.concatenate([f32(w1s), f32(w1a)], axis=0)
    h = jnp.maximum(jnp.dot(sa, w1, precision=hp) + b1, 0.0)
    h = jnp.maximum(jnp.dot(h, f32(w2), precision=hp) + b2, 0.0)
    return jnp.dot(h, f32(w3_row).T, precision=hp) + b3


if __name__ == "__main__":
    key = jax.random.PRNGKey(0)

    configs = [
        # Small smoke test (single grid step, tm = 8).
        dict(batch=2, state_dim=12, action_dim=4, hidden=(32, 32),
             block_rows=2048),
        # Module-default hidden sizes; B fits one (raised) tile -> single step.
        dict(batch=600, state_dim=17, action_dim=6, hidden=(256, 256),
             block_rows=2048),
        # Force the multi-tile path: even, near-equal batch tiles + ragged
        # last-tile masking + VMEM-resident weights across grid steps.
        dict(batch=600, state_dim=17, action_dim=6, hidden=(256, 256),
             block_rows=256),
    ]

    for cfg in configs:
        key, ks, ka, kp = jax.random.split(key, 4)
        # Stream activations in bf16 (halves the only B-scaling HBM traffic;
        # the MXU rounds to bf16 at default precision regardless).
        state = jax.random.normal(
            ks, (cfg["batch"], cfg["state_dim"]), jnp.float32).astype(jnp.bfloat16)
        action = jax.random.normal(
            ka, (cfg["batch"], cfg["action_dim"]), jnp.float32).astype(jnp.bfloat16)
        params = init_critic_params(kp, cfg["state_dim"], cfg["action_dim"],
                                    cfg["hidden"])

        q = jax.block_until_ready(
            critic_forward(state, action, params, block_rows=cfg["block_rows"]))
        q_ref = reference_forward(state, action, params)

        assert q.shape == (cfg["batch"], 1)
        assert q.dtype == jnp.float32
        # Kernel uses MXU default precision (bf16 multiply, f32 accumulate);
        # reference is f32 HIGHEST on the same bf16-stored operands, so only
        # intermediate rounding differs -> small tolerance.
        assert jnp.allclose(q, q_ref, atol=1e-2, rtol=1e-2), (
            float(jnp.max(jnp.abs(q - q_ref))))

    print("KERNEL_OK")
</pallas_src>

<mosaic_0001>
module attributes {stable_mosaic.version = 11 : i64} {
  func.func @_critic_kernel(%arg0: i32, %arg1: memref<8x12xbf16, #tpu.memory_space<vmem>>, %arg2: memref<8x4xbf16, #tpu.memory_space<vmem>>, %arg3: memref<12x32xbf16, #tpu.memory_space<vmem>>, %arg4: memref<4x32xbf16, #tpu.memory_space<vmem>>, %arg5: memref<1x32xf32, #tpu.memory_space<vmem>>, %arg6: memref<32x32xbf16, #tpu.memory_space<vmem>>, %arg7: memref<1x32xf32, #tpu.memory_space<vmem>>, %arg8: memref<1x32xbf16, #tpu.memory_space<vmem>>, %arg9: memref<1x1xf32, #tpu.memory_space<vmem>>, %arg10: memref<8x1xf32, #tpu.memory_space<vmem>>) attributes {dimension_semantics = [#tpu.dimension_semantics<parallel>], iteration_bounds = array<i64: 1>, scalar_prefetch = 0 : i64, scratch_operands = 0 : i64, tpu.core_type = #tpu.core_type<tc>, window_params = [{transform_indices = @transform_0, window_bounds = array<i64: 8, 12>}, {transform_indices = @transform_1, window_bounds = array<i64: 8, 4>}, {pipeline_mode = #tpu.pipeline_mode<synchronous>, transform_indices = @transform_2, window_bounds = array<i64: 12, 32>}, {pipeline_mode = #tpu.pipeline_mode<synchronous>, transform_indices = @transform_3, window_bounds = array<i64: 4, 32>}, {pipeline_mode = #tpu.pipeline_mode<synchronous>, transform_indices = @transform_4, window_bounds = array<i64: 1, 32>}, {pipeline_mode = #tpu.pipeline_mode<synchronous>, transform_indices = @transform_5, window_bounds = array<i64: 32, 32>}, {pipeline_mode = #tpu.pipeline_mode<synchronous>, transform_indices = @transform_6, window_bounds = array<i64: 1, 32>}, {pipeline_mode = #tpu.pipeline_mode<synchronous>, transform_indices = @transform_7, window_bounds = array<i64: 1, 32>}, {pipeline_mode = #tpu.pipeline_mode<synchronous>, transform_indices = @transform_8, window_bounds = array<i64: 1, 1>}, {transform_indices = @transform_9, window_bounds = array<i64: 8, 1>}]} {
    %c0 = arith.constant 0 : index
    %c0_0 = arith.constant 0 : index
    %0 = vector.load %arg1[%c0, %c0_0] : memref<8x12xbf16, #tpu.memory_space<vmem>>, vector<8x12xbf16>
    %c0_1 = arith.constant 0 : index
    %c0_2 = arith.constant 0 : index
    %1 = vector.load %arg3[%c0_1, %c0_2] : memref<12x32xbf16, #tpu.memory_space<vmem>>, vector<12x32xbf16>
    %cst = arith.constant dense<0.000000e+00> : vector<8x32xf32>
    %2 = tpu.matmul %0, %1, %cst {dimension_numbers = #tpu.dot_dimension_numbers<[1], [0], [0], [1], [0, 0, 1, 1], [], []>} : vector<8x12xbf16>, vector<12x32xbf16>, vector<8x32xf32> -> vector<8x32xf32>
    %c0_3 = arith.constant 0 : index
    %c0_4 = arith.constant 0 : index
    %3 = vector.load %arg2[%c0_3, %c0_4] : memref<8x4xbf16, #tpu.memory_space<vmem>>, vector<8x4xbf16>
    %c0_5 = arith.constant 0 : index
    %c0_6 = arith.constant 0 : index
    %4 = vector.load %arg4[%c0_5, %c0_6] : memref<4x32xbf16, #tpu.memory_space<vmem>>, vector<4x32xbf16>
    %cst_7 = arith.constant dense<0.000000e+00> : vector<8x32xf32>
    %5 = tpu.matmul %3, %4, %cst_7 {dimension_numbers = #tpu.dot_dimension_numbers<[1], [0], [0], [1], [0, 0, 1, 1], [], []>} : vector<8x4xbf16>, vector<4x32xbf16>, vector<8x32xf32> -> vector<8x32xf32>
    %6 = arith.addf %2, %5 : vector<8x32xf32>
    %c0_8 = arith.constant 0 : index
    %c0_9 = arith.constant 0 : index
    %7 = vector.load %arg5[%c0_8, %c0_9] : memref<1x32xf32, #tpu.memory_space<vmem>>, vector<1x32xf32>
    %8 = vector.broadcast %7 : vector<1x32xf32> to vector<8x32xf32>
    %9 = arith.addf %6, %8 : vector<8x32xf32>
    %cst_10 = arith.constant 0.000000e+00 : f32
    %10 = vector.broadcast %cst_10 : f32 to vector<8x32xf32>
    %11 = arith.maximumf %9, %10 : vector<8x32xf32>
    %c0_11 = arith.constant 0 : index
    %c0_12 = arith.constant 0 : index
    %12 = vector.load %arg6[%c0_11, %c0_12] : memref<32x32xbf16, #tpu.memory_space<vmem>>, vector<32x32xbf16>
    %cst_13 = arith.constant dense<0.000000e+00> : vector<8x32xf32>
    %13 = tpu.matmul %11, %12, %cst_13 {dimension_numbers = #tpu.dot_dimension_numbers<[1], [0], [0], [1], [0, 0, 1, 1], [], []>} : vector<8x32xf32>, vector<32x32xbf16>, vector<8x32xf32> -> vector<8x32xf32>
    %c0_14 = arith.constant 0 : index
    %c0_15 = arith.constant 0 : index
    %14 = vector.load %arg7[%c0_14, %c0_15] : memref<1x32xf32, #tpu.memory_space<vmem>>, vector<1x32xf32>
    %15 = vector.broadcast %14 : vector<1x32xf32> to vector<8x32xf32>
    %16 = arith.addf %13, %15 : vector<8x32xf32>
    %cst_16 = arith.constant 0.000000e+00 : f32
    %17 = vector.broadcast %cst_16 : f32 to vector<8x32xf32>
    %18 = arith.maximumf %16, %17 : vector<8x32xf32>
    %c0_17 = arith.constant 0 : index
    %c0_18 = arith.constant 0 : index
    %19 = vector.load %arg8[%c0_17, %c0_18] : memref<1x32xbf16, #tpu.memory_space<vmem>>, vector<1x32xbf16>
    %20 = arith.extf %19 : vector<1x32xbf16> to vector<1x32xf32>
    %21 = vector.broadcast %20 : vector<1x32xf32> to vector<8x32xf32>
    %22 = arith.mulf %18, %21 : vector<8x32xf32>
    %cst_19 = arith.constant dense<0.000000e+00> : vector<8xf32>
    %23 = vector.multi_reduction <add>, %22, %cst_19 [1] : vector<8x32xf32> to vector<8xf32>
    %24 = vector.shape_cast %23 : vector<8xf32> to vector<8x1xf32>
    %c0_20 = arith.constant 0 : index
    %c0_21 = arith.constant 0 : index
    %25 = vector.load %arg9[%c0_20, %c0_21] : memref<1x1xf32, #tpu.memory_space<vmem>>, vector<1x1xf32>
    %26 = vector.broadcast %25 : vector<1x1xf32> to vector<8x1xf32>
    %27 = arith.addf %24, %26 : vector<8x1xf32>
    %c0_22 = arith.constant 0 : index
    %c0_23 = arith.constant 0 : index
    %28 = vector.load %arg10[%c0_22, %c0_23] : memref<8x1xf32, #tpu.memory_space<vmem>>, vector<8x1xf32>
    tpu.vector_store %arg10[%c0_22, %c0_23], %27 {strides = array<i32>} : memref<8x1xf32, #tpu.memory_space<vmem>>, vector<8x1xf32>,
    return
  }
  func.func @transform_0(%arg0: i32) -> (i32, i32) {
    %c0_i32 = arith.constant 0 : i32
    %c0_i32_0 = arith.constant 0 : i32
    return %arg0, %c0_i32 : i32, i32
  }
  func.func @transform_1(%arg0: i32) -> (i32, i32) {
    %c0_i32 = arith.constant 0 : i32
    %c0_i32_0 = arith.constant 0 : i32
    return %arg0, %c0_i32 : i32, i32
  }
  func.func @transform_2(%arg0: i32) -> (i32, i32) {
    %c0_i32 = arith.constant 0 : i32
    %c0_i32_0 = arith.constant 0 : i32
    %c0_i32_1 = arith.constant 0 : i32
    return %c0_i32, %c0_i32_0 : i32, i32
  }
  func.func @transform_3(%arg0: i32) -> (i32, i32) {
    %c0_i32 = arith.constant 0 : i32
    %c0_i32_0 = arith.constant 0 : i32
    %c0_i32_1 = arith.constant 0 : i32
    return %c0_i32, %c0_i32_0 : i32, i32
  }
  func.func @transform_4(%arg0: i32) -> (i32, i32) {
    %c0_i32 = arith.constant 0 : i32
    %c0_i32_0 = arith.constant 0 : i32
    %c0_i32_1 = arith.constant 0 : i32
    return %c0_i32, %c0_i32_0 : i32, i32
  }
  func.func @transform_5(%arg0: i32) -> (i32, i32) {
    %c0_i32 = arith.constant 0 : i32
    %c0_i32_0 = arith.constant 0 : i32
    %c0_i32_1 = arith.constant 0 : i32
    return %c0_i32, %c0_i32_0 : i32, i32
  }
  func.func @transform_6(%arg0: i32) -> (i32, i32) {
    %c0_i32 = arith.constant 0 : i32
    %c0_i32_0 = arith.constant 0 : i32
    %c0_i32_1 = arith.constant 0 : i32
    return %c0_i32, %c0_i32_0 : i32, i32
  }
  func.func @transform_7(%arg0: i32) -> (i32, i32) {
    %c0_i32 = arith.constant 0 : i32
    %c0_i32_0 = arith.constant 0 : i32
    %c0_i32_1 = arith.constant 0 : i32
    return %c0_i32, %c0_i32_0 : i32, i32
  }
  func.func @transform_8(%arg0: i32) -> (i32, i32) {
    %c0_i32 = arith.constant 0 : i32
    %c0_i32_0 = arith.constant 0 : i32
    %c0_i32_1 = arith.constant 0 : i32
    return %c0_i32, %c0_i32_0 : i32, i32
  }
  func.func @transform_9(%arg0: i32) -> (i32, i32) {
    %c0_i32 = arith.constant 0 : i32
    %c0_i32_0 = arith.constant 0 : i32
    return %arg0, %c0_i32 : i32, i32
  }
}

</mosaic_0001>

<llo_original>
// kernel: tpu_custom_call.1
$region0: #{tpu_custom_call.1}
  #allocation0 [shape = 'u32[]', space=smem, size = 0x4, offset = 0x4, fixed_abs, tag = 'smem constant byte address 0x4 - core index']
  #allocation1 [shape = 'u32[72,128]{1,0:T(1,128)}', space=vmem, size = 0x9000, scoped, tag = 'internal scratch']
  #allocation2 [shape = 'f32[1,1]{1,0:T(1,128)S(1)}', space=vmem, size = 0x200, scoped, tag = 'scoped memory for tpu_custom_call.1']
  %s0 = inlined_call_operand.vmem [shape: bf16[2,12], index: 0, kind: input, shape index: {}]
  %s1 = inlined_call_operand.hbm [shape: bf16[2,4], index: 1, kind: input, shape index: {}]
  %s2 = inlined_call_operand.hbm [shape: bf16[12,32], index: 2, kind: input, shape index: {}]
  %s3 = inlined_call_operand.vmem [shape: bf16[4,32], index: 3, kind: input, shape index: {}]
  %s4 = inlined_call_operand.vmem [shape: f32[1,32], index: 4, kind: input, shape index: {}]
  %s5 = inlined_call_operand.hbm [shape: bf16[32,32], index: 5, kind: input, shape index: {}]
  %s6 = inlined_call_operand.vmem [shape: f32[1,32], index: 6, kind: input, shape index: {}]
  %s7 = inlined_call_operand.vmem [shape: bf16[1,32], index: 7, kind: input, shape index: {}]
  %s8 = inlined_call_operand.<no memory space> [shape: f32[1,1], index: 8, kind: input, shape index: {}]
  %s9 = inlined_call_operand.vmem [shape: f32[2,1], index: 9, kind: output, shape index: {}]
  %s10 = sld [smem:[#allocation0]]
  $region88: #{tpu_custom_call.1} parent=0
    _
  %s12 = ssub.s32 1, %s10
  %s13 = scalar_select 0, %s12, %s10
  %v14 = vstv %s8
  %15 = vst [vmem:[#allocation2] sm:$0x1] %v14
  $region1: #{tpu_custom_call.1} parent=0
    #allocation3 [shape = 'u8[2048]{0}', space=vmem, size = 0x800, scoped, tag = 'input window, operand 1, single buffered']
    #allocation4 [shape = 's32[1]{0}', space=sflag, size = 0x4, scoped, tag = 'scoped memory for tpu_custom_call.1']
    #allocation5 [shape = 'u8[4096]{0}', space=vmem, size = 0x1000, scoped, tag = 'input window, operand 2, single buffered']
    #allocation6 [shape = 's32[1]{0}', space=sflag, size = 0x4, scoped, tag = 'scoped memory for tpu_custom_call.1']
    #allocation7 [shape = 'u8[8192]{0}', space=vmem, size = 0x2000, scoped, tag = 'input window, operand 5, single buffered']
    #allocation8 [shape = 'u8[4096]{0}', space=vmem, size = 0x1000, scoped, tag = 'output window, operand 0, single buffered']
    %16 = vsyncpa [#allocation4], 0
    %17 = vsyncpa [#allocation6], 0
    // Predicated region
    $region2: #{tpu_custom_call.1} parent=1 // pred_check
      _
    $region3: #{tpu_custom_call.1} parent=1 // pred_check_branch
      %19 = sbr.rel (0) target = $region5
    $region4: #{tpu_custom_call.1} parent=1 // pred_region
      _
    $region5: #{tpu_custom_call.1} parent=1 // pred_fallthru
      _
    // Predicated region
    $region6: #{tpu_custom_call.1} parent=1 // pred_check
      _
    $region7: #{tpu_custom_call.1} parent=1 // pred_check_branch
      %21 = sbr.rel (0) target = $region9
    $region8: #{tpu_custom_call.1} parent=1 // pred_region
      %23 = vsyncadd [#allocation4], 48
      %s24 = sshll.u32 %s1, 4
      %s25 = int_to_ptr.hbm [resolvable:$true] %s24
      %s26 = sshll.u32 [#allocation3], 4
      %s27 = int_to_ptr.vmem [resolvable:$true] %s26
      %32 = dma.hbm_to_vmem [thread:$0]  %s25, 16, %s27, [#allocation4], 16, 16, 1
    $region9: #{tpu_custom_call.1} parent=1 // pred_fallthru
      _
    // Predicated region
    $region10: #{tpu_custom_call.1} parent=1 // pred_check
      _
    $region11: #{tpu_custom_call.1} parent=1 // pred_check_branch
      %34 = sbr.rel (0) target = $region13
    $region12: #{tpu_custom_call.1} parent=1 // pred_region
      %36 = vsyncadd [#allocation6], 0
      %s37 = sshll.u32 %s2, 4
      %s38 = int_to_ptr.hbm [resolvable:$true] %s37
      %s39 = sshll.u32 [#allocation5], 4
      %s40 = int_to_ptr.vmem [resolvable:$true] %s39
      %45 = dma.hbm_to_vmem [thread:$0]  %s38, 128, %s40, [#allocation6], 64, 64, 4
    $region13: #{tpu_custom_call.1} parent=1 // pred_fallthru
      _
    // Predicated region
    $region14: #{tpu_custom_call.1} parent=1 // pred_check
      _
    $region15: #{tpu_custom_call.1} parent=1 // pred_check_branch
      %47 = sbr.rel (0) target = $region17
    $region16: #{tpu_custom_call.1} parent=1 // pred_region
      _
    $region17: #{tpu_custom_call.1} parent=1 // pred_fallthru
      _
    // Predicated region
    $region18: #{tpu_custom_call.1} parent=1 // pred_check
      _
    $region19: #{tpu_custom_call.1} parent=1 // pred_check_branch
      %49 = sbr.rel (0) target = $region21
    $region20: #{tpu_custom_call.1} parent=1 // pred_region
      _
    $region21: #{tpu_custom_call.1} parent=1 // pred_fallthru
      _
    // Predicated region
    $region22: #{tpu_custom_call.1} parent=1 // pred_check
      _
    $region23: #{tpu_custom_call.1} parent=1 // pred_check_branch
      %51 = sbr.rel (0) target = $region25
    $region24: #{tpu_custom_call.1} parent=1 // pred_region
      %53 = vsyncadd [#allocation6], 0
      %s54 = sshll.u32 %s5, 4
      %s55 = int_to_ptr.hbm [resolvable:$true] %s54
      %s56 = sshll.u32 [#allocation7], 4
      %s57 = int_to_ptr.vmem [resolvable:$true] %s56
      %62 = dma.hbm_to_vmem [thread:$0]  %s55, 256, %s57, [#allocation6], 64, 64, 4
    $region25: #{tpu_custom_call.1} parent=1 // pred_fallthru
      _
    // Predicated region
    $region26: #{tpu_custom_call.1} parent=1 // pred_check
      _
    $region27: #{tpu_custom_call.1} parent=1 // pred_check_branch
      %64 = sbr.rel (0) target = $region29
    $region28: #{tpu_custom_call.1} parent=1 // pred_region
      _
    $region29: #{tpu_custom_call.1} parent=1 // pred_fallthru
      _
    // Predicated region
    $region30: #{tpu_custom_call.1} parent=1 // pred_check
      _
    $region31: #{tpu_custom_call.1} parent=1 // pred_check_branch
      %66 = sbr.rel (0) target = $region33
    $region32: #{tpu_custom_call.1} parent=1 // pred_region
      _
    $region33: #{tpu_custom_call.1} parent=1 // pred_fallthru
      _
    // Predicated region
    $region34: #{tpu_custom_call.1} parent=1 // pred_check
      _
    $region35: #{tpu_custom_call.1} parent=1 // pred_check_branch
      %68 = sbr.rel (0) target = $region37
    $region36: #{tpu_custom_call.1} parent=1 // pred_region
      _
    $region37: #{tpu_custom_call.1} parent=1 // pred_fallthru
      _
    // Predicated region
    $region38: #{tpu_custom_call.1} parent=1 // pred_check
      _
    $region39: #{tpu_custom_call.1} parent=1 // pred_check_branch
      %70 = sbr.rel (0) target = $region41
    $region40: #{tpu_custom_call.1} parent=1 // pred_region
      %72 = dma.done [#allocation4], 64
    $region41: #{tpu_custom_call.1} parent=1 // pred_fallthru
      _
    // Predicated region
    $region42: #{tpu_custom_call.1} parent=1 // pred_check
      _
    $region43: #{tpu_custom_call.1} parent=1 // pred_check_branch
      %74 = sbr.rel (0) target = $region45
    $region44: #{tpu_custom_call.1} parent=1 // pred_region
      %76 = dma.done [#allocation6], 128
    $region45: #{tpu_custom_call.1} parent=1 // pred_fallthru
      _
    // Predicated region
    $region46: #{tpu_custom_call.1} parent=1 // pred_check
      _
    $region47: #{tpu_custom_call.1} parent=1 // pred_check_branch
      %78 = sbr.rel (0) target = $region49
    $region48: #{tpu_custom_call.1} parent=1 // pred_region
      %80 = dma.done [#allocation6], 256
    $region49: #{tpu_custom_call.1} parent=1 // pred_fallthru
      _
    %v82 = vld [vmem:[%s0] sm:$0x1]
    %v83 = vld [vmem:[%s0 + $0x1] sm:$0x1]
    %v84 = vld [vmem:[%s0 + $0x2] sm:$0x1]
    %v85 = vld [vmem:[%s0 + $0x3] sm:$0x1]
    %v86 = vld [vmem:[#allocation5] sm:$0xf]
    %v87 = vld [vmem:[#allocation5 + $0x4] sm:$0x3]
    %v88 = vld [vmem:[#allocation3] sm:$0x1]
    %v89 = vld [vmem:[#allocation3 + $0x1] sm:$0x1]
    %v90 = vld [vmem:[#allocation3 + $0x2] sm:$0x1]
    %v91 = vld [vmem:[#allocation3 + $0x3] sm:$0x1]
    %v92 = vld [vmem:[%s3] sm:$0x3]
    %94 = vst [vmem:[#allocation1] ss:$9 sm:$0xff] %v88
    %s96 = scalar_lea.vmem [#allocation1], 1
    %97 = vst [vmem:[%s96] ss:$9 sm:$0xff] %v89
    %s99 = scalar_lea.vmem [#allocation1], 2
    %100 = vst [vmem:[%s99] ss:$9 sm:$0xff] %v90
    %s102 = scalar_lea.vmem [#allocation1], 3
    %103 = vst [vmem:[%s102] ss:$9 sm:$0xff] %v91
    %v104 = vld [vmem:[#allocation1] sm:$0xff]
    %vm105 = vcmask 31744
    %v106 = vsel %vm105, %v104, 0
    %vm108 = vcmask 1041408
    %v110 = vsel %vm108, %v92, 0
    %112 = vmatpush.bf16.msra.mxu0 0
    %113 = vmatpush.bf16.msra.mxu0 0
    %114 = vmatpush.bf16.msra.mxu0 0
    %115 = vmatpush.bf16.msra.mxu0 0
    %116 = vmatpush.bf16.msra.mxu0 0
    %117 = vmatpush.bf16.msra.mxu0 0
    %118 = vmatpush.bf16.msra.mxu0 0
    %119 = vmatpush.bf16.msra.mxu0 %v110
    %120 = vmatmul.bf16.gmra.mxu0 %v106
    %v121 = vpop.f32.mrf.mxu0
    %v122 = vadd.f32 0.0, %v121
    %v123 = vpop.f32.mrf.mxu0
    %124 = vdwg.mxu0
    %126 = vst [vmem:[#allocation1] ss:$9 sm:$0xff] %v82
    %s128 = scalar_lea.vmem [#allocation1], 1
    %129 = vst [vmem:[%s128] ss:$9 sm:$0xff] %v83
    %s131 = scalar_lea.vmem [#allocation1], 2
    %132 = vst [vmem:[%s131] ss:$9 sm:$0xff] %v84
    %s134 = scalar_lea.vmem [#allocation1], 3
    %135 = vst [vmem:[%s134] ss:$9 sm:$0xff] %v85
    %v136 = vld [vmem:[#allocation1] sm:$0xff]
    %v139 = vunpack.c.l.b16 %v86
    %v140 = vunpack.c.l.b16 %v87
    %v141 = vpack.c.b16 %v140, %v139
    %vm142 = vcmask 97280
    %v143 = vsel %vm142, %v136, 0
    %vm145 = vcmask 1045504
    %v147 = vsel %vm145, %v141, 0
    %149 = vmatpush.bf16.msra.mxu0 0
    %150 = vmatpush.bf16.msra.mxu0 0
    %151 = vmatpush.bf16.msra.mxu0 0
    %152 = vmatpush.bf16.msra.mxu0 0
    %153 = vmatpush.bf16.msra.mxu0 0
    %154 = vmatpush.bf16.msra.mxu0 0
    %155 = vmatpush.bf16.msra.mxu0 0
    %156 = vmatpush.bf16.msra.mxu0 %v147
    %157 = vmatmul.bf16.gmra.mxu0 %v143
    %v158 = vpop.f32.mrf.mxu0
    %v159 = vadd.f32 %v122, %v158
    %v160 = vpop.f32.mrf.mxu0
    %161 = vdwg.mxu0
    %v162 = vld [vmem:[%s4] sm:$0x1]
    %v164 = vperm.slane %v162, 0
    %v166 = vadd.f32 %v159, %v164
    %v167 = vmax.f32 %v166, 0.0
    %v168 = vld [vmem:[#allocation7] sm:$0xf]
    %v169 = vld [vmem:[#allocation7 + $0x4] sm:$0xf]
    %v170 = vld [vmem:[#allocation7 + $0x8] sm:$0xf]
    %v171 = vld [vmem:[#allocation7 + $0xc] sm:$0xf]
    %v172 = vld [vmem:[%s6] sm:$0x1]
    %v174 = vperm.slane %v172, 0
    %v180 = vunpack.c.l.b16 %v168
    %v181 = vunpack.c.l.b16 %v169
    %v182 = vunpack.c.l.b16 %v170
    %v183 = vunpack.c.l.b16 %v171
    %v184 = vpack.c.b16 %v181, %v180
    %v185 = vpack.c.b16 %v183, %v182
    %vm188 = vcmask 261120
    %v190 = vsel %vm188, %v167, 0
    %192 = vmatpush.bf16.msra.mxu0 0
    %193 = vmatpush.bf16.msra.mxu0 0
    %194 = vmatpush.bf16.msra.mxu0 0
    %195 = vmatpush.bf16.msra.mxu0 0
    %196 = vmatpush.bf16.msra.mxu0 0
    %197 = vmatpush.bf16.msra.mxu0 0
    %198 = vmatpush.bf16.msra.mxu0 %v185
    %199 = vmatpush.bf16.msra.mxu0 %v184
    %200 = vmatmul.f32.gmra.mxu0 %v190
    %v201 = vpop.f32.mrf.mxu0
    %v202 = vadd.f32 %v174, %v201
    %203 = vdwg.mxu0
    %v204 = vmax.f32 %v202, 0.0
    %v205 = vld [vmem:[%s7] sm:$0x1]
    %v206 = vunpack.c.l.bf16 %v205
    %v207 = vperm.slane %v206, 0
    %v208 = vmul.f32 %v204, %v207
    %v209 = vsel %vm188, %v208, 0.0
    %210 = vadd.xlane.f32.xlu0 %v209
    %v211 = vpop.xlane.xlu0 %210
    %v212 = vld [vmem:[#allocation2] sm:$0x1]
    %v214 = vperm.slane %v212, 0
    %v216 = vadd.f32 %v211, %v214
    %vm217 = vcmask 7168
    %218 = vst.msk [vmem:[#allocation8] sm:$0xff] %vm217, %v216
    // Predicated region
    $region50: #{tpu_custom_call.1} parent=1 // pred_check
      _
    $region51: #{tpu_custom_call.1} parent=1 // pred_check_branch
      %220 = sbr.rel (0) target = $region53
    $region52: #{tpu_custom_call.1} parent=1 // pred_region
      // Predicated region
      $region54: #{tpu_custom_call.1} parent=52 // pred_check
        _
      $region55: #{tpu_custom_call.1} parent=52 // pred_check_branch
        %222 = sbr.rel (0) target = $region57
      $region56: #{tpu_custom_call.1} parent=52 // pred_region
        // Predicated region
        $region58: #{tpu_custom_call.1} parent=56 // pred_check
          _
        $region59: #{tpu_custom_call.1} parent=56 // pred_check_branch
          %224 = sbr.rel target = $region61
        $region60: #{tpu_custom_call.1} parent=56 // pred_region
          // Predicated region
          $region73: #{tpu_custom_call.1} parent=60 // pred_check
            _
          $region74: #{tpu_custom_call.1} parent=60 // pred_check_branch
            %240 = sbr.rel (0) target = $region76
          $region75: #{tpu_custom_call.1} parent=60 // pred_region
            %s242 = ssub.s32 4, 1
            loop: start=0, step=1, limit=1
            $region77: #{tpu_custom_call.1} parent=75 // loop_pre_header
              _
            $region78: #{tpu_custom_call.1} parent=75 // loop_header
              %s244 = sphi 0, %s248
              %p245 = scmp.ge.s32.totalorder %s244, 1
              %s249 = sphi [#allocation8], [#allocation8]
              %s250 = sphi %s9, %s9
            $region79: #{tpu_custom_call.1} parent=75 // loop_header_branch
              %247 = sbr.rel (%p245) target = $region83
            $region80: #{tpu_custom_call.1} parent=75 // loop_body
              %v251 = vld [vmem:[%s249] sm:%s242]
              %252 = vst [vmem:[%s250] sm:%s242] %v251
            $region81: #{tpu_custom_call.1} parent=75 // loop_footer
              %s248 = sadd.s32 1, %s244
            $region82: #{tpu_custom_call.1} parent=75 // loop_footer_branch
              %243 = sbr.rel target = $region78
            $region83: #{tpu_custom_call.1} parent=75 // loop_exit
              _
          $region76: #{tpu_custom_call.1} parent=60 // pred_fallthru
            _
        $region61: #{tpu_custom_call.1} parent=56 // pred_fallthru
          _
        // Predicated region
        $region62: #{tpu_custom_call.1} parent=56 // pred_check
          _
        $region63: #{tpu_custom_call.1} parent=56 // pred_check_branch
          %226 = sbr.rel (0) target = $region65
        $region64: #{tpu_custom_call.1} parent=56 // pred_region
          %s228 = ssub.s32 4, 1
          loop: start=0, step=1, limit=1
          $region66: #{tpu_custom_call.1} parent=64 // loop_pre_header
            _
          $region67: #{tpu_custom_call.1} parent=64 // loop_header
            %s230 = sphi 0, %s234
            %p231 = scmp.ge.s32.totalorder %s230, 1
            %s235 = sphi [#allocation8], [#allocation8]
            %s236 = sphi %s9, %s9
          $region68: #{tpu_custom_call.1} parent=64 // loop_header_branch
            %233 = sbr.rel (%p231) target = $region72
          $region69: #{tpu_custom_call.1} parent=64 // loop_body
            %v237 = vld [vmem:[%s235] sm:%s228]
            %238 = vst [vmem:[%s236] sm:%s228] %v237
          $region70: #{tpu_custom_call.1} parent=64 // loop_footer
            %s234 = sadd.s32 1, %s230
          $region71: #{tpu_custom_call.1} parent=64 // loop_footer_branch
            %229 = sbr.rel target = $region67
          $region72: #{tpu_custom_call.1} parent=64 // loop_exit
            _
        $region65: #{tpu_custom_call.1} parent=56 // pred_fallthru
          _
      $region57: #{tpu_custom_call.1} parent=52 // pred_fallthru
        _
      %253 = vnop
    $region53: #{tpu_custom_call.1} parent=1 // pred_fallthru
      _
    // Predicated region
    $region84: #{tpu_custom_call.1} parent=1 // pred_check
      _
    $region85: #{tpu_custom_call.1} parent=1 // pred_check_branch
      %255 = sbr.rel (0) target = $region87
    $region86: #{tpu_custom_call.1} parent=1 // pred_region
      _
    $region87: #{tpu_custom_call.1} parent=1 // pred_fallthru
      _
    %256 = vsyncpa [#allocation4], 1
    %257 = vsyncpa [#allocation6], 1

</llo_original>
